<compile_context>
chip_gen: v6e
topology: v6e:2x2x1
jax: 0.10.0
libtpu: 0.0.40
codegen_flags: <defaults>
</compile_context>

<pallas_src>
import jax
import jax.numpy as jnp
from jax.experimental import pallas as pl
from jax.experimental.pallas import tpu as pltpu

J = 8             # number of locations (batch dim of the bmm)
NUM_FEATURES = 32 # per-location feature width


def idprob3_kernel(x_ref, w1_ref, w2_ref, o_ref):
    x = x_ref[...]      # (J, J, F)  all batches at once
    w1 = w1_ref[...]    # (J, F, F)
    w2 = w2_ref[...]    # (J, 1, F)  (pre-transposed w2, glue in wrapper)

    # h[b] = relu(inp[b] @ w1[b])  -- one batched MXU matmul, f32 accumulate.
    h = jnp.maximum(
        jnp.einsum("bjf,bfg->bjg", x, w1, preferred_element_type=jnp.float32),
        0.0)                                            # (J, J, F)

    # logits[b, j] = sum_f h[b, j, f] * w2[b, f]
    # VPU multiply + lane reduce instead of a degenerate (J,F)@(F,1) MXU matmul.
    logits = jnp.sum(h * w2, axis=-1)                   # (J, J)

    # softmax over the J logits of each batch row (PyTorch F.softmax dim=1
    # on the .view(-1, J) logits).
    m = jnp.max(logits, axis=-1, keepdims=True)
    e = jnp.exp(logits - m)
    o_ref[...] = (e / jnp.sum(e, axis=-1, keepdims=True)).astype(o_ref.dtype)


def idprob3_forward(inp, w1, w2):
    """inp: (J, J, F) f32, w1: (J, F, F) f32, w2: (J, F, 1) f32 -> (J, J) f32."""
    Jb, _, F = inp.shape
    w2_t = jnp.transpose(w2, (0, 2, 1))  # (J, 1, F) -- glue, outside the kernel

    return pl.pallas_call(
        idprob3_kernel,
        out_shape=jax.ShapeDtypeStruct((Jb, Jb), jnp.float32),
        # Single invocation, full-array blocks resident in VMEM (no grid).
        in_specs=[
            pl.BlockSpec(memory_space=pltpu.MemorySpace.VMEM),  # inp
            pl.BlockSpec(memory_space=pltpu.MemorySpace.VMEM),  # w1
            pl.BlockSpec(memory_space=pltpu.MemorySpace.VMEM),  # w2.T
        ],
        out_specs=pl.BlockSpec(memory_space=pltpu.MemorySpace.VMEM),
    )(inp, w1, w2_t)


if __name__ == "__main__":
    key = jax.random.PRNGKey(0)
    k_inp, k_w1, k_w2 = jax.random.split(key, 3)

    # Deterministic synthetic parameters (shapes from IdProb3.__init__) & input.
    inp = jax.random.normal(k_inp, (J, J, NUM_FEATURES), dtype=jnp.float32)
    w1 = jax.random.normal(k_w1, (J, NUM_FEATURES, NUM_FEATURES), dtype=jnp.float32)
    w2 = jax.random.normal(k_w2, (J, NUM_FEATURES, 1), dtype=jnp.float32)

    out = jax.block_until_ready(idprob3_forward(inp, w1, w2))

    # Pure-JAX reference of the PyTorch forward, for a correctness gate.
    h_ref = jnp.maximum(jnp.einsum("bjf,bfg->bjg", inp, w1), 0.0)
    logits_ref = jnp.einsum("bjf,bfo->bjo", h_ref, w2).reshape(-1, J)
    ref = jax.nn.softmax(logits_ref, axis=-1)

    assert out.shape == (J, J)
    assert bool(jnp.allclose(out, ref, atol=1e-5, rtol=1e-5)), "kernel/reference mismatch"
    print("KERNEL_OK")
</pallas_src>

<mosaic_0001>
module attributes {stable_mosaic.version = 11 : i64} {
  func.func @idprob3_kernel(%arg0: memref<8x8x32xf32, #tpu.memory_space<vmem>>, %arg1: memref<8x32x32xf32, #tpu.memory_space<vmem>>, %arg2: memref<8x1x32xf32, #tpu.memory_space<vmem>>, %arg3: memref<8x8xf32, #tpu.memory_space<vmem>>) attributes {dimension_semantics = [], scalar_prefetch = 0 : i64, scratch_operands = 0 : i64, tpu.core_type = #tpu.core_type<tc>} {
    %c0 = arith.constant 0 : index
    %c0_0 = arith.constant 0 : index
    %c0_1 = arith.constant 0 : index
    %0 = vector.load %arg0[%c0, %c0_0, %c0_1] : memref<8x8x32xf32, #tpu.memory_space<vmem>>, vector<8x8x32xf32>
    %c0_2 = arith.constant 0 : index
    %c0_3 = arith.constant 0 : index
    %c0_4 = arith.constant 0 : index
    %1 = vector.load %arg1[%c0_2, %c0_3, %c0_4] : memref<8x32x32xf32, #tpu.memory_space<vmem>>, vector<8x32x32xf32>
    %c0_5 = arith.constant 0 : index
    %c0_6 = arith.constant 0 : index
    %c0_7 = arith.constant 0 : index
    %2 = vector.load %arg2[%c0_5, %c0_6, %c0_7] : memref<8x1x32xf32, #tpu.memory_space<vmem>>, vector<8x1x32xf32>
    "tpu.trace_start"() <{level = 10 : i32, message = "bjf,bfg->bjg"}> : () -> ()
    %cst = arith.constant dense<0.000000e+00> : vector<8x8x32xf32>
    %3 = tpu.matmul %0, %1, %cst {dimension_numbers = #tpu.dot_dimension_numbers<[2], [1], [1], [2], [0, 0, 0, 1, 1, 2], [0], [0]>} : vector<8x8x32xf32>, vector<8x32x32xf32>, vector<8x8x32xf32> -> vector<8x8x32xf32>
    "tpu.trace_stop"() : () -> ()
    %cst_8 = arith.constant 0.000000e+00 : f32
    %4 = vector.broadcast %cst_8 : f32 to vector<8x8x32xf32>
    %5 = arith.maximumf %3, %4 : vector<8x8x32xf32>
    %6 = vector.broadcast %2 : vector<8x1x32xf32> to vector<8x8x32xf32>
    %7 = arith.mulf %5, %6 : vector<8x8x32xf32>
    %cst_9 = arith.constant dense<0.000000e+00> : vector<8x8xf32>
    %8 = vector.multi_reduction <add>, %7, %cst_9 [2] : vector<8x8x32xf32> to vector<8x8xf32>
    %cst_10 = arith.constant dense<0xFF800000> : vector<8xf32>
    %9 = vector.multi_reduction <maximumf>, %8, %cst_10 [1] : vector<8x8xf32> to vector<8xf32>
    %10 = vector.shape_cast %9 : vector<8xf32> to vector<8x1xf32>
    %11 = vector.broadcast %10 : vector<8x1xf32> to vector<8x8xf32>
    %12 = arith.subf %8, %11 : vector<8x8xf32>
    %13 = math.exp %12 : vector<8x8xf32>
    %cst_11 = arith.constant dense<0.000000e+00> : vector<8xf32>
    %14 = vector.multi_reduction <add>, %13, %cst_11 [1] : vector<8x8xf32> to vector<8xf32>
    %15 = vector.shape_cast %14 : vector<8xf32> to vector<8x1xf32>
    %16 = vector.broadcast %15 : vector<8x1xf32> to vector<8x8xf32>
    %17 = arith.divf %13, %16 : vector<8x8xf32>
    %c0_12 = arith.constant 0 : index
    %c0_13 = arith.constant 0 : index
    %18 = vector.load %arg3[%c0_12, %c0_13] : memref<8x8xf32, #tpu.memory_space<vmem>>, vector<8x8xf32>
    tpu.vector_store %arg3[%c0_12, %c0_13], %17 {strides = array<i32>} : memref<8x8xf32, #tpu.memory_space<vmem>>, vector<8x8xf32>,
    return
  }
}

</mosaic_0001>

<llo_original>
// kernel: tpu_custom_call.1
$region0: #{tpu_custom_call.1}
  #allocation0 [shape = 'u32[]', space=smem, size = 0x4, offset = 0x4, fixed_abs, tag = 'smem constant byte address 0x4 - core index']
  #allocation1 [shape = 'u32[144,128]{1,0:T(1,128)}', space=vmem, size = 0x12000, scoped, tag = 'internal scratch']
  %s0 = inlined_call_operand.hbm [shape: f32[8,8,32], index: 0, kind: input, shape index: {}]
  %s1 = inlined_call_operand.hbm [shape: f32[8,32,32], index: 1, kind: input, shape index: {}]
  %s2 = inlined_call_operand.hbm [shape: f32[8,1,32], index: 2, kind: input, shape index: {}]
  %s3 = inlined_call_operand.hbm [shape: f32[8,8], index: 3, kind: output, shape index: {}]
  %s4 = sld [smem:[#allocation0]]
  $region34: #{tpu_custom_call.1} parent=0
    _
  %s6 = ssub.s32 1, %s4
  %s7 = scalar_select 0, %s6, %s4
  $region1: #{tpu_custom_call.1} parent=0
    #allocation2 [shape = 'u8[32768]{0}', space=vmem, size = 0x8000, scoped, tag = 'input window, operand 0, single buffered']
    #allocation3 [shape = 's32[1]{0}', space=sflag, size = 0x4, scoped, tag = 'scoped memory for tpu_custom_call.1']
    #allocation4 [shape = 's32[1]{0}', space=sflag, size = 0x4, scoped, tag = 'scoped memory for tpu_custom_call.1']
    #allocation5 [shape = 'u8[131072]{0}', space=vmem, size = 0x20000, scoped, tag = 'input window, operand 1, single buffered']
    #allocation6 [shape = 's32[1]{0}', space=sflag, size = 0x4, scoped, tag = 'scoped memory for tpu_custom_call.1']
    #allocation7 [shape = 'u8[4096]{0}', space=vmem, size = 0x1000, scoped, tag = 'input window, operand 2, single buffered']
    #allocation8 [shape = 'u8[4096]{0}', space=vmem, size = 0x1000, scoped, tag = 'output window, operand 0, single buffered']
    %8 = vsyncpa [#allocation3], 0
    %9 = vsyncpa [#allocation6], 0
    %10 = vsyncpa [#allocation4], 0
    // Predicated region
    $region2: #{tpu_custom_call.1} parent=1 // pred_check
      _
    $region3: #{tpu_custom_call.1} parent=1 // pred_check_branch
      %12 = sbr.rel (0) target = $region5
    $region4: #{tpu_custom_call.1} parent=1 // pred_region
      %s14 = ssub.s32 1024, 1024
      %15 = vsyncadd [#allocation3], %s14
      %s16 = sshll.u32 [#allocation2], 4
      %s17 = int_to_ptr.vmem [resolvable:$true] %s16
      %22 = dma.hbm_to_vmem [thread:$0]  %s0, 1024, %s17, [#allocation3], 128, 128, 8
    $region5: #{tpu_custom_call.1} parent=1 // pred_fallthru
      _
    // Predicated region
    $region6: #{tpu_custom_call.1} parent=1 // pred_check
      _
    $region7: #{tpu_custom_call.1} parent=1 // pred_check_branch
      %24 = sbr.rel (0) target = $region9
    $region8: #{tpu_custom_call.1} parent=1 // pred_region
      %s26 = ssub.s32 4096, 4096
      %27 = vsyncadd [#allocation6], %s26
      %s28 = sshll.u32 [#allocation5], 4
      %s29 = int_to_ptr.vmem [resolvable:$true] %s28
      %34 = dma.hbm_to_vmem [thread:$0]  %s1, 4096, %s29, [#allocation6], 128, 128, 8
    $region9: #{tpu_custom_call.1} parent=1 // pred_fallthru
      _
    // Predicated region
    $region10: #{tpu_custom_call.1} parent=1 // pred_check
      _
    $region11: #{tpu_custom_call.1} parent=1 // pred_check_branch
      %36 = sbr.rel (0) target = $region13
    $region12: #{tpu_custom_call.1} parent=1 // pred_region
      %s38 = ssub.s32 128, 128
      %39 = vsyncadd [#allocation6], %s38
      %s40 = sshll.u32 [#allocation7], 4
      %s41 = int_to_ptr.vmem [resolvable:$true] %s40
      %46 = dma.hbm_to_vmem [thread:$0]  %s2, 128, %s41, [#allocation6], 16, 16, 1
    $region13: #{tpu_custom_call.1} parent=1 // pred_fallthru
      _
    // Predicated region
    $region14: #{tpu_custom_call.1} parent=1 // pred_check
      _
    $region15: #{tpu_custom_call.1} parent=1 // pred_check_branch
      %48 = sbr.rel (0) target = $region17
    $region16: #{tpu_custom_call.1} parent=1 // pred_region
      %49 = dma.done [#allocation3], 1024
    $region17: #{tpu_custom_call.1} parent=1 // pred_fallthru
      _
    // Predicated region
    $region18: #{tpu_custom_call.1} parent=1 // pred_check
      _
    $region19: #{tpu_custom_call.1} parent=1 // pred_check_branch
      %51 = sbr.rel (0) target = $region21
    $region20: #{tpu_custom_call.1} parent=1 // pred_region
      %52 = dma.done [#allocation6], 4096
    $region21: #{tpu_custom_call.1} parent=1 // pred_fallthru
      _
    // Predicated region
    $region22: #{tpu_custom_call.1} parent=1 // pred_check
      _
    $region23: #{tpu_custom_call.1} parent=1 // pred_check_branch
      %54 = sbr.rel (0) target = $region25
    $region24: #{tpu_custom_call.1} parent=1 // pred_region
      %55 = dma.done [#allocation6], 128
    $region25: #{tpu_custom_call.1} parent=1 // pred_fallthru
      _
    %v56 = vld [vmem:[#allocation2] sm:$0xff]
    %v57 = vld [vmem:[#allocation2 + $0x8] sm:$0xff]
    %v58 = vld [vmem:[#allocation2 + $0x10] sm:$0xff]
    %v59 = vld [vmem:[#allocation2 + $0x18] sm:$0xff]
    %v60 = vld [vmem:[#allocation2 + $0x20] sm:$0xff]
    %v61 = vld [vmem:[#allocation2 + $0x28] sm:$0xff]
    %v62 = vld [vmem:[#allocation2 + $0x30] sm:$0xff]
    %v63 = vld [vmem:[#allocation2 + $0x38] sm:$0xff]
    %v64 = vld [vmem:[#allocation5] sm:$0xff]
    %v65 = vld [vmem:[#allocation5 + $0x8] sm:$0xff]
    %v66 = vld [vmem:[#allocation5 + $0x10] sm:$0xff]
    %v67 = vld [vmem:[#allocation5 + $0x18] sm:$0xff]
    %v68 = vld [vmem:[#allocation5 + $0x20] sm:$0xff]
    %v69 = vld [vmem:[#allocation5 + $0x28] sm:$0xff]
    %v70 = vld [vmem:[#allocation5 + $0x30] sm:$0xff]
    %v71 = vld [vmem:[#allocation5 + $0x38] sm:$0xff]
    %v72 = vld [vmem:[#allocation5 + $0x40] sm:$0xff]
    %v73 = vld [vmem:[#allocation5 + $0x48] sm:$0xff]
    %v74 = vld [vmem:[#allocation5 + $0x50] sm:$0xff]
    %v75 = vld [vmem:[#allocation5 + $0x58] sm:$0xff]
    %v76 = vld [vmem:[#allocation5 + $0x60] sm:$0xff]
    %v77 = vld [vmem:[#allocation5 + $0x68] sm:$0xff]
    %v78 = vld [vmem:[#allocation5 + $0x70] sm:$0xff]
    %v79 = vld [vmem:[#allocation5 + $0x78] sm:$0xff]
    %v80 = vld [vmem:[#allocation5 + $0x80] sm:$0xff]
    %v81 = vld [vmem:[#allocation5 + $0x88] sm:$0xff]
    %v82 = vld [vmem:[#allocation5 + $0x90] sm:$0xff]
    %v83 = vld [vmem:[#allocation5 + $0x98] sm:$0xff]
    %v84 = vld [vmem:[#allocation5 + $0xa0] sm:$0xff]
    %v85 = vld [vmem:[#allocation5 + $0xa8] sm:$0xff]
    %v86 = vld [vmem:[#allocation5 + $0xb0] sm:$0xff]
    %v87 = vld [vmem:[#allocation5 + $0xb8] sm:$0xff]
    %v88 = vld [vmem:[#allocation5 + $0xc0] sm:$0xff]
    %v89 = vld [vmem:[#allocation5 + $0xc8] sm:$0xff]
    %v90 = vld [vmem:[#allocation5 + $0xd0] sm:$0xff]
    %v91 = vld [vmem:[#allocation5 + $0xd8] sm:$0xff]
    %v92 = vld [vmem:[#allocation5 + $0xe0] sm:$0xff]
    %v93 = vld [vmem:[#allocation5 + $0xe8] sm:$0xff]
    %v94 = vld [vmem:[#allocation5 + $0xf0] sm:$0xff]
    %v95 = vld [vmem:[#allocation5 + $0xf8] sm:$0xff]
    %v96 = vld [vmem:[#allocation7] sm:$0x1]
    %v97 = vld [vmem:[#allocation7 + $0x1] sm:$0x1]
    %v98 = vld [vmem:[#allocation7 + $0x2] sm:$0x1]
    %v99 = vld [vmem:[#allocation7 + $0x3] sm:$0x1]
    %v100 = vld [vmem:[#allocation7 + $0x4] sm:$0x1]
    %v101 = vld [vmem:[#allocation7 + $0x5] sm:$0x1]
    %v102 = vld [vmem:[#allocation7 + $0x6] sm:$0x1]
    %v103 = vld [vmem:[#allocation7 + $0x7] sm:$0x1]
    %vm104 = vcmask 261120
    %v106 = vsel %vm104, %v56, 0
    %108 = vmatprep.subr.mxu0 0.0
    %109 = vmatpush1.msra.mxu0 0.0
    %110 = vmatprep.subr.mxu0 0.0
    %111 = vmatpush1.msra.mxu0 0.0
    %112 = vmatprep.subr.mxu0 0.0
    %113 = vmatpush1.msra.mxu0 0.0
    %114 = vmatprep.subr.mxu0 0.0
    %115 = vmatpush1.msra.mxu0 0.0
    %116 = vmatprep.subr.mxu0 0.0
    %117 = vmatpush1.msra.mxu0 0.0
    %118 = vmatprep.subr.mxu0 0.0
    %119 = vmatpush1.msra.mxu0 0.0
    %120 = vmatprep.subr.mxu0 0.0
    %121 = vmatpush1.msra.mxu0 0.0
    %122 = vmatprep.subr.mxu0 0.0
    %123 = vmatpush1.msra.mxu0 0.0
    %124 = vmatprep.subr.mxu0 0.0
    %125 = vmatpush1.msra.mxu0 0.0
    %126 = vmatprep.subr.mxu0 0.0
    %127 = vmatpush1.msra.mxu0 0.0
    %128 = vmatprep.subr.mxu0 0.0
    %129 = vmatpush1.msra.mxu0 0.0
    %130 = vmatprep.subr.mxu0 0.0
    %131 = vmatpush1.msra.mxu0 0.0
    %132 = vmatprep.subr.mxu0 0.0
    %133 = vmatpush1.msra.mxu0 %v67
    %134 = vmatprep.subr.mxu0 0.0
    %135 = vmatpush1.msra.mxu0 %v66
    %136 = vmatprep.subr.mxu0 0.0
    %137 = vmatpush1.msra.mxu0 %v65
    %138 = vmatprep.subr.mxu0 0.0
    %139 = vmatpush1.msra.mxu0 %v64
    %140 = vmatprep.subr.mxu0 0.0
    %141 = vmatpush2.msra.mxu0 0.0
    %142 = vmatprep.subr.mxu0 0.0
    %143 = vmatpush2.msra.mxu0 0.0
    %144 = vmatprep.subr.mxu0 0.0
    %145 = vmatpush2.msra.mxu0 0.0
    %146 = vmatprep.subr.mxu0 0.0
    %147 = vmatpush2.msra.mxu0 0.0
    %148 = vmatprep.subr.mxu0 0.0
    %149 = vmatpush2.msra.mxu0 0.0
    %150 = vmatprep.subr.mxu0 0.0
    %151 = vmatpush2.msra.mxu0 0.0
    %152 = vmatprep.subr.mxu0 0.0
    %153 = vmatpush2.msra.mxu0 0.0
    %154 = vmatprep.subr.mxu0 0.0
    %155 = vmatpush2.msra.mxu0 0.0
    %156 = vmatprep.subr.mxu0 0.0
    %157 = vmatpush2.msra.mxu0 0.0
    %158 = vmatprep.subr.mxu0 0.0
    %159 = vmatpush2.msra.mxu0 0.0
    %160 = vmatprep.subr.mxu0 0.0
    %161 = vmatpush2.msra.mxu0 0.0
    %162 = vmatprep.subr.mxu0 0.0
    %163 = vmatpush2.msra.mxu0 0.0
    %164 = vmatprep.subr.mxu0 0.0
    %165 = vmatpush2.msra.mxu0 0.0
    %166 = vmatprep.subr.mxu0 0.0
    %167 = vmatpush2.msra.mxu0 0.0
    %168 = vmatprep.subr.mxu0 0.0
    %169 = vmatpush2.msra.mxu0 0.0
    %170 = vmatprep.subr.mxu0 0.0
    %171 = vmatpush2.msra.mxu0 0.0
    %172 = vmatprep.mubr.f32.mxu0 0.0
    %173 = vmatmul.mubr.f32.gmra.mxu0 %v106
    %v174 = vpop.f32.mrf.mxu0
    %v175 = vadd.f32 0.0, %v174
    %v176 = vpop.f32.mrf.mxu0
    %177 = vdwg.mxu0
    %v179 = vsel %vm104, %v57, 0
    %181 = vmatprep.subr.mxu0 0.0
    %182 = vmatpush1.msra.mxu0 0.0
    %183 = vmatprep.subr.mxu0 0.0
    %184 = vmatpush1.msra.mxu0 0.0
    %185 = vmatprep.subr.mxu0 0.0
    %186 = vmatpush1.msra.mxu0 0.0
    %187 = vmatprep.subr.mxu0 0.0
    %188 = vmatpush1.msra.mxu0 0.0
    %189 = vmatprep.subr.mxu0 0.0
    %190 = vmatpush1.msra.mxu0 0.0
    %191 = vmatprep.subr.mxu0 0.0
    %192 = vmatpush1.msra.mxu0 0.0
    %193 = vmatprep.subr.mxu0 0.0
    %194 = vmatpush1.msra.mxu0 0.0
    %195 = vmatprep.subr.mxu0 0.0
    %196 = vmatpush1.msra.mxu0 0.0
    %197 = vmatprep.subr.mxu0 0.0
    %198 = vmatpush1.msra.mxu0 0.0
    %199 = vmatprep.subr.mxu0 0.0
    %200 = vmatpush1.msra.mxu0 0.0
    %201 = vmatprep.subr.mxu0 0.0
    %202 = vmatpush1.msra.mxu0 0.0
    %203 = vmatprep.subr.mxu0 0.0
    %204 = vmatpush1.msra.mxu0 0.0
    %205 = vmatprep.subr.mxu0 0.0
    %206 = vmatpush1.msra.mxu0 %v71
    %207 = vmatprep.subr.mxu0 0.0
    %208 = vmatpush1.msra.mxu0 %v70
    %209 = vmatprep.subr.mxu0 0.0
    %210 = vmatpush1.msra.mxu0 %v69
    %211 = vmatprep.subr.mxu0 0.0
    %212 = vmatpush1.msra.mxu0 %v68
    %213 = vmatprep.subr.mxu0 0.0
    %214 = vmatpush2.msra.mxu0 0.0
    %215 = vmatprep.subr.mxu0 0.0
    %216 = vmatpush2.msra.mxu0 0.0
    %217 = vmatprep.subr.mxu0 0.0
    %218 = vmatpush2.msra.mxu0 0.0
    %219 = vmatprep.subr.mxu0 0.0
    %220 = vmatpush2.msra.mxu0 0.0
    %221 = vmatprep.subr.mxu0 0.0
    %222 = vmatpush2.msra.mxu0 0.0
    %223 = vmatprep.subr.mxu0 0.0
    %224 = vmatpush2.msra.mxu0 0.0
    %225 = vmatprep.subr.mxu0 0.0
    %226 = vmatpush2.msra.mxu0 0.0
    %227 = vmatprep.subr.mxu0 0.0
    %228 = vmatpush2.msra.mxu0 0.0
    %229 = vmatprep.subr.mxu0 0.0
    %230 = vmatpush2.msra.mxu0 0.0
    %231 = vmatprep.subr.mxu0 0.0
    %232 = vmatpush2.msra.mxu0 0.0
    %233 = vmatprep.subr.mxu0 0.0
    %234 = vmatpush2.msra.mxu0 0.0
    %235 = vmatprep.subr.mxu0 0.0
    %236 = vmatpush2.msra.mxu0 0.0
    %237 = vmatprep.subr.mxu0 0.0
    %238 = vmatpush2.msra.mxu0 0.0
    %239 = vmatprep.subr.mxu0 0.0
    %240 = vmatpush2.msra.mxu0 0.0
    %241 = vmatprep.subr.mxu0 0.0
    %242 = vmatpush2.msra.mxu0 0.0
    %243 = vmatprep.subr.mxu0 0.0
    %244 = vmatpush2.msra.mxu0 0.0
    %245 = vmatprep.mubr.f32.mxu0 0.0
    %246 = vmatmul.mubr.f32.gmra.mxu0 %v179
    %v247 = vpop.f32.mrf.mxu0
    %v248 = vadd.f32 0.0, %v247
    %v249 = vpop.f32.mrf.mxu0
    %250 = vdwg.mxu0
    %v252 = vsel %vm104, %v58, 0
    %254 = vmatprep.subr.mxu0 0.0
    %255 = vmatpush1.msra.mxu0 0.0
    %256 = vmatprep.subr.mxu0 0.0
    %257 = vmatpush1.msra.mxu0 0.0
    %258 = vmatprep.subr.mxu0 0.0
    %259 = vmatpush1.msra.mxu0 0.0
    %260 = vmatprep.subr.mxu0 0.0
    %261 = vmatpush1.msra.mxu0 0.0
    %262 = vmatprep.subr.mxu0 0.0
    %263 = vmatpush1.msra.mxu0 0.0
    %264 = vmatprep.subr.mxu0 0.0
    %265 = vmatpush1.msra.mxu0 0.0
    %266 = vmatprep.subr.mxu0 0.0
    %267 = vmatpush1.msra.mxu0 0.0
    %268 = vmatprep.subr.mxu0 0.0
    %269 = vmatpush1.msra.mxu0 0.0
    %270 = vmatprep.subr.mxu0 0.0
    %271 = vmatpush1.msra.mxu0 0.0
    %272 = vmatprep.subr.mxu0 0.0
    %273 = vmatpush1.msra.mxu0 0.0
    %274 = vmatprep.subr.mxu0 0.0
    %275 = vmatpush1.msra.mxu0 0.0
    %276 = vmatprep.subr.mxu0 0.0
    %277 = vmatpush1.msra.mxu0 0.0
    %278 = vmatprep.subr.mxu0 0.0
    %279 = vmatpush1.msra.mxu0 %v75
    %280 = vmatprep.subr.mxu0 0.0
    %281 = vmatpush1.msra.mxu0 %v74
    %282 = vmatprep.subr.mxu0 0.0
    %283 = vmatpush1.msra.mxu0 %v73
    %284 = vmatprep.subr.mxu0 0.0
    %285 = vmatpush1.msra.mxu0 %v72
    %286 = vmatprep.subr.mxu0 0.0
    %287 = vmatpush2.msra.mxu0 0.0
    %288 = vmatprep.subr.mxu0 0.0
    %289 = vmatpush2.msra.mxu0 0.0
    %290 = vmatprep.subr.mxu0 0.0
    %291 = vmatpush2.msra.mxu0 0.0
    %292 = vmatprep.subr.mxu0 0.0
    %293 = vmatpush2.msra.mxu0 0.0
    %294 = vmatprep.subr.mxu0 0.0
    %295 = vmatpush2.msra.mxu0 0.0
    %296 = vmatprep.subr.mxu0 0.0
    %297 = vmatpush2.msra.mxu0 0.0
    %298 = vmatprep.subr.mxu0 0.0
    %299 = vmatpush2.msra.mxu0 0.0
    %300 = vmatprep.subr.mxu0 0.0
    %301 = vmatpush2.msra.mxu0 0.0
    %302 = vmatprep.subr.mxu0 0.0
    %303 = vmatpush2.msra.mxu0 0.0
    %304 = vmatprep.subr.mxu0 0.0
    %305 = vmatpush2.msra.mxu0 0.0
    %306 = vmatprep.subr.mxu0 0.0
    %307 = vmatpush2.msra.mxu0 0.0
    %308 = vmatprep.subr.mxu0 0.0
    %309 = vmatpush2.msra.mxu0 0.0
    %310 = vmatprep.subr.mxu0 0.0
    %311 = vmatpush2.msra.mxu0 0.0
    %312 = vmatprep.subr.mxu0 0.0
    %313 = vmatpush2.msra.mxu0 0.0
    %314 = vmatprep.subr.mxu0 0.0
    %315 = vmatpush2.msra.mxu0 0.0
    %316 = vmatprep.subr.mxu0 0.0
    %317 = vmatpush2.msra.mxu0 0.0
    %318 = vmatprep.mubr.f32.mxu0 0.0
    %319 = vmatmul.mubr.f32.gmra.mxu0 %v252
    %v320 = vpop.f32.mrf.mxu0
    %v321 = vadd.f32 0.0, %v320
    %v322 = vpop.f32.mrf.mxu0
    %323 = vdwg.mxu0
    %v325 = vsel %vm104, %v59, 0
    %327 = vmatprep.subr.mxu0 0.0
    %328 = vmatpush1.msra.mxu0 0.0
    %329 = vmatprep.subr.mxu0 0.0
    %330 = vmatpush1.msra.mxu0 0.0
    %331 = vmatprep.subr.mxu0 0.0
    %332 = vmatpush1.msra.mxu0 0.0
    %333 = vmatprep.subr.mxu0 0.0
    %334 = vmatpush1.msra.mxu0 0.0
    %335 = vmatprep.subr.mxu0 0.0
    %336 = vmatpush1.msra.mxu0 0.0
    %337 = vmatprep.subr.mxu0 0.0
    %338 = vmatpush1.msra.mxu0 0.0
    %339 = vmatprep.subr.mxu0 0.0
    %340 = vmatpush1.msra.mxu0 0.0
    %341 = vmatprep.subr.mxu0 0.0
    %342 = vmatpush1.msra.mxu0 0.0
    %343 = vmatprep.subr.mxu0 0.0
    %344 = vmatpush1.msra.mxu0 0.0
    %345 = vmatprep.subr.mxu0 0.0
    %346 = vmatpush1.msra.mxu0 0.0
    %347 = vmatprep.subr.mxu0 0.0
    %348 = vmatpush1.msra.mxu0 0.0
    %349 = vmatprep.subr.mxu0 0.0
    %350 = vmatpush1.msra.mxu0 0.0
    %351 = vmatprep.subr.mxu0 0.0
    %352 = vmatpush1.msra.mxu0 %v79
    %353 = vmatprep.subr.mxu0 0.0
    %354 = vmatpush1.msra.mxu0 %v78
    %355 = vmatprep.subr.mxu0 0.0
    %356 = vmatpush1.msra.mxu0 %v77
    %357 = vmatprep.subr.mxu0 0.0
    %358 = vmatpush1.msra.mxu0 %v76
    %359 = vmatprep.subr.mxu0 0.0
    %360 = vmatpush2.msra.mxu0 0.0
    %361 = vmatprep.subr.mxu0 0.0
    %362 = vmatpush2.msra.mxu0 0.0
    %363 = vmatprep.subr.mxu0 0.0
    %364 = vmatpush2.msra.mxu0 0.0
    %365 = vmatprep.subr.mxu0 0.0
    %366 = vmatpush2.msra.mxu0 0.0
    %367 = vmatprep.subr.mxu0 0.0
    %368 = vmatpush2.msra.mxu0 0.0
    %369 = vmatprep.subr.mxu0 0.0
    %370 = vmatpush2.msra.mxu0 0.0
    %371 = vmatprep.subr.mxu0 0.0
    %372 = vmatpush2.msra.mxu0 0.0
    %373 = vmatprep.subr.mxu0 0.0
    %374 = vmatpush2.msra.mxu0 0.0
    %375 = vmatprep.subr.mxu0 0.0
    %376 = vmatpush2.msra.mxu0 0.0
    %377 = vmatprep.subr.mxu0 0.0
    %378 = vmatpush2.msra.mxu0 0.0
    %379 = vmatprep.subr.mxu0 0.0
    %380 = vmatpush2.msra.mxu0 0.0
    %381 = vmatprep.subr.mxu0 0.0
    %382 = vmatpush2.msra.mxu0 0.0
    %383 = vmatprep.subr.mxu0 0.0
    %384 = vmatpush2.msra.mxu0 0.0
    %385 = vmatprep.subr.mxu0 0.0
    %386 = vmatpush2.msra.mxu0 0.0
    %387 = vmatprep.subr.mxu0 0.0
    %388 = vmatpush2.msra.mxu0 0.0
    %389 = vmatprep.subr.mxu0 0.0
    %390 = vmatpush2.msra.mxu0 0.0
    %391 = vmatprep.mubr.f32.mxu0 0.0
    %392 = vmatmul.mubr.f32.gmra.mxu0 %v325
    %v393 = vpop.f32.mrf.mxu0
    %v394 = vadd.f32 0.0, %v393
    %v395 = vpop.f32.mrf.mxu0
    %396 = vdwg.mxu0
    %v398 = vsel %vm104, %v60, 0
    %400 = vmatprep.subr.mxu0 0.0
    %401 = vmatpush1.msra.mxu0 0.0
    %402 = vmatprep.subr.mxu0 0.0
    %403 = vmatpush1.msra.mxu0 0.0
    %404 = vmatprep.subr.mxu0 0.0
    %405 = vmatpush1.msra.mxu0 0.0
    %406 = vmatprep.subr.mxu0 0.0
    %407 = vmatpush1.msra.mxu0 0.0
    %408 = vmatprep.subr.mxu0 0.0
    %409 = vmatpush1.msra.mxu0 0.0
    %410 = vmatprep.subr.mxu0 0.0
    %411 = vmatpush1.msra.mxu0 0.0
    %412 = vmatprep.subr.mxu0 0.0
    %413 = vmatpush1.msra.mxu0 0.0
    %414 = vmatprep.subr.mxu0 0.0
    %415 = vmatpush1.msra.mxu0 0.0
    %416 = vmatprep.subr.mxu0 0.0
    %417 = vmatpush1.msra.mxu0 0.0
    %418 = vmatprep.subr.mxu0 0.0
    %419 = vmatpush1.msra.mxu0 0.0
    %420 = vmatprep.subr.mxu0 0.0
    %421 = vmatpush1.msra.mxu0 0.0
    %422 = vmatprep.subr.mxu0 0.0
    %423 = vmatpush1.msra.mxu0 0.0
    %424 = vmatprep.subr.mxu0 0.0
    %425 = vmatpush1.msra.mxu0 %v83
    %426 = vmatprep.subr.mxu0 0.0
    %427 = vmatpush1.msra.mxu0 %v82
    %428 = vmatprep.subr.mxu0 0.0
    %429 = vmatpush1.msra.mxu0 %v81
    %430 = vmatprep.subr.mxu0 0.0
    %431 = vmatpush1.msra.mxu0 %v80
    %432 = vmatprep.subr.mxu0 0.0
    %433 = vmatpush2.msra.mxu0 0.0
    %434 = vmatprep.subr.mxu0 0.0
    %435 = vmatpush2.msra.mxu0 0.0
    %436 = vmatprep.subr.mxu0 0.0
    %437 = vmatpush2.msra.mxu0 0.0
    %438 = vmatprep.subr.mxu0 0.0
    %439 = vmatpush2.msra.mxu0 0.0
    %440 = vmatprep.subr.mxu0 0.0
    %441 = vmatpush2.msra.mxu0 0.0
    %442 = vmatprep.subr.mxu0 0.0
    %443 = vmatpush2.msra.mxu0 0.0
    %444 = vmatprep.subr.mxu0 0.0
    %445 = vmatpush2.msra.mxu0 0.0
    %446 = vmatprep.subr.mxu0 0.0
    %447 = vmatpush2.msra.mxu0 0.0
    %448 = vmatprep.subr.mxu0 0.0
    %449 = vmatpush2.msra.mxu0 0.0
    %450 = vmatprep.subr.mxu0 0.0
    %451 = vmatpush2.msra.mxu0 0.0
    %452 = vmatprep.subr.mxu0 0.0
    %453 = vmatpush2.msra.mxu0 0.0
    %454 = vmatprep.subr.mxu0 0.0
    %455 = vmatpush2.msra.mxu0 0.0
    %456 = vmatprep.subr.mxu0 0.0
    %457 = vmatpush2.msra.mxu0 0.0
    %458 = vmatprep.subr.mxu0 0.0
    %459 = vmatpush2.msra.mxu0 0.0
    %460 = vmatprep.subr.mxu0 0.0
    %461 = vmatpush2.msra.mxu0 0.0
    %462 = vmatprep.subr.mxu0 0.0
    %463 = vmatpush2.msra.mxu0 0.0
    %464 = vmatprep.mubr.f32.mxu0 0.0
    %465 = vmatmul.mubr.f32.gmra.mxu0 %v398
    %v466 = vpop.f32.mrf.mxu0
    %v467 = vadd.f32 0.0, %v466
    %v468 = vpop.f32.mrf.mxu0
    %469 = vdwg.mxu0
    %v471 = vsel %vm104, %v61, 0
    %473 = vmatprep.subr.mxu0 0.0
    %474 = vmatpush1.msra.mxu0 0.0
    %475 = vmatprep.subr.mxu0 0.0
    %476 = vmatpush1.msra.mxu0 0.0
    %477 = vmatprep.subr.mxu0 0.0
    %478 = vmatpush1.msra.mxu0 0.0
    %479 = vmatprep.subr.mxu0 0.0
    %480 = vmatpush1.msra.mxu0 0.0
    %481 = vmatprep.subr.mxu0 0.0
    %482 = vmatpush1.msra.mxu0 0.0
    %483 = vmatprep.subr.mxu0 0.0
    %484 = vmatpush1.msra.mxu0 0.0
    %485 = vmatprep.subr.mxu0 0.0
    %486 = vmatpush1.msra.mxu0 0.0
    %487 = vmatprep.subr.mxu0 0.0
    %488 = vmatpush1.msra.mxu0 0.0
    %489 = vmatprep.subr.mxu0 0.0
    %490 = vmatpush1.msra.mxu0 0.0
    %491 = vmatprep.subr.mxu0 0.0
    %492 = vmatpush1.msra.mxu0 0.0
    %493 = vmatprep.subr.mxu0 0.0
    %494 = vmatpush1.msra.mxu0 0.0
    %495 = vmatprep.subr.mxu0 0.0
    %496 = vmatpush1.msra.mxu0 0.0
    %497 = vmatprep.subr.mxu0 0.0
    %498 = vmatpush1.msra.mxu0 %v87
    %499 = vmatprep.subr.mxu0 0.0
    %500 = vmatpush1.msra.mxu0 %v86
    %501 = vmatprep.subr.mxu0 0.0
    %502 = vmatpush1.msra.mxu0 %v85
    %503 = vmatprep.subr.mxu0 0.0
    %504 = vmatpush1.msra.mxu0 %v84
    %505 = vmatprep.subr.mxu0 0.0
    %506 = vmatpush2.msra.mxu0 0.0
    %507 = vmatprep.subr.mxu0 0.0
    %508 = vmatpush2.msra.mxu0 0.0
    %509 = vmatprep.subr.mxu0 0.0
    %510 = vmatpush2.msra.mxu0 0.0
    %511 = vmatprep.subr.mxu0 0.0
    %512 = vmatpush2.msra.mxu0 0.0
    %513 = vmatprep.subr.mxu0 0.0
    %514 = vmatpush2.msra.mxu0 0.0
    %515 = vmatprep.subr.mxu0 0.0
    %516 = vmatpush2.msra.mxu0 0.0
    %517 = vmatprep.subr.mxu0 0.0
    %518 = vmatpush2.msra.mxu0 0.0
    %519 = vmatprep.subr.mxu0 0.0
    %520 = vmatpush2.msra.mxu0 0.0
    %521 = vmatprep.subr.mxu0 0.0
    %522 = vmatpush2.msra.mxu0 0.0
    %523 = vmatprep.subr.mxu0 0.0
    %524 = vmatpush2.msra.mxu0 0.0
    %525 = vmatprep.subr.mxu0 0.0
    %526 = vmatpush2.msra.mxu0 0.0
    %527 = vmatprep.subr.mxu0 0.0
    %528 = vmatpush2.msra.mxu0 0.0
    %529 = vmatprep.subr.mxu0 0.0
    %530 = vmatpush2.msra.mxu0 0.0
    %531 = vmatprep.subr.mxu0 0.0
    %532 = vmatpush2.msra.mxu0 0.0
    %533 = vmatprep.subr.mxu0 0.0
    %534 = vmatpush2.msra.mxu0 0.0
    %535 = vmatprep.subr.mxu0 0.0
    %536 = vmatpush2.msra.mxu0 0.0
    %537 = vmatprep.mubr.f32.mxu0 0.0
    %538 = vmatmul.mubr.f32.gmra.mxu0 %v471
    %v539 = vpop.f32.mrf.mxu0
    %v540 = vadd.f32 0.0, %v539
    %v541 = vpop.f32.mrf.mxu0
    %542 = vdwg.mxu0
    %v544 = vsel %vm104, %v62, 0
    %546 = vmatprep.subr.mxu0 0.0
    %547 = vmatpush1.msra.mxu0 0.0
    %548 = vmatprep.subr.mxu0 0.0
    %549 = vmatpush1.msra.mxu0 0.0
    %550 = vmatprep.subr.mxu0 0.0
    %551 = vmatpush1.msra.mxu0 0.0
    %552 = vmatprep.subr.mxu0 0.0
    %553 = vmatpush1.msra.mxu0 0.0
    %554 = vmatprep.subr.mxu0 0.0
    %555 = vmatpush1.msra.mxu0 0.0
    %556 = vmatprep.subr.mxu0 0.0
    %557 = vmatpush1.msra.mxu0 0.0
    %558 = vmatprep.subr.mxu0 0.0
    %559 = vmatpush1.msra.mxu0 0.0
    %560 = vmatprep.subr.mxu0 0.0
    %561 = vmatpush1.msra.mxu0 0.0
    %562 = vmatprep.subr.mxu0 0.0
    %563 = vmatpush1.msra.mxu0 0.0
    %564 = vmatprep.subr.mxu0 0.0
    %565 = vmatpush1.msra.mxu0 0.0
    %566 = vmatprep.subr.mxu0 0.0
    %567 = vmatpush1.msra.mxu0 0.0
    %568 = vmatprep.subr.mxu0 0.0
    %569 = vmatpush1.msra.mxu0 0.0
    %570 = vmatprep.subr.mxu0 0.0
    %571 = vmatpush1.msra.mxu0 %v91
    %572 = vmatprep.subr.mxu0 0.0
    %573 = vmatpush1.msra.mxu0 %v90
    %574 = vmatprep.subr.mxu0 0.0
    %575 = vmatpush1.msra.mxu0 %v89
    %576 = vmatprep.subr.mxu0 0.0
    %577 = vmatpush1.msra.mxu0 %v88
    %578 = vmatprep.subr.mxu0 0.0
    %579 = vmatpush2.msra.mxu0 0.0
    %580 = vmatprep.subr.mxu0 0.0
    %581 = vmatpush2.msra.mxu0 0.0
    %582 = vmatprep.subr.mxu0 0.0
    %583 = vmatpush2.msra.mxu0 0.0
    %584 = vmatprep.subr.mxu0 0.0
    %585 = vmatpush2.msra.mxu0 0.0
    %586 = vmatprep.subr.mxu0 0.0
    %587 = vmatpush2.msra.mxu0 0.0
    %588 = vmatprep.subr.mxu0 0.0
    %589 = vmatpush2.msra.mxu0 0.0
    %590 = vmatprep.subr.mxu0 0.0
    %591 = vmatpush2.msra.mxu0 0.0
    %592 = vmatprep.subr.mxu0 0.0
    %593 = vmatpush2.msra.mxu0 0.0
    %594 = vmatprep.subr.mxu0 0.0
    %595 = vmatpush2.msra.mxu0 0.0
    %596 = vmatprep.subr.mxu0 0.0
    %597 = vmatpush2.msra.mxu0 0.0
    %598 = vmatprep.subr.mxu0 0.0
    %599 = vmatpush2.msra.mxu0 0.0
    %600 = vmatprep.subr.mxu0 0.0
    %601 = vmatpush2.msra.mxu0 0.0
    %602 = vmatprep.subr.mxu0 0.0
    %603 = vmatpush2.msra.mxu0 0.0
    %604 = vmatprep.subr.mxu0 0.0
    %605 = vmatpush2.msra.mxu0 0.0
    %606 = vmatprep.subr.mxu0 0.0
    %607 = vmatpush2.msra.mxu0 0.0
    %608 = vmatprep.subr.mxu0 0.0
    %609 = vmatpush2.msra.mxu0 0.0
    %610 = vmatprep.mubr.f32.mxu0 0.0
    %611 = vmatmul.mubr.f32.gmra.mxu0 %v544
    %v612 = vpop.f32.mrf.mxu0
    %v613 = vadd.f32 0.0, %v612
    %v614 = vpop.f32.mrf.mxu0
    %615 = vdwg.mxu0
    %v617 = vsel %vm104, %v63, 0
    %619 = vmatprep.subr.mxu0 0.0
    %620 = vmatpush1.msra.mxu0 0.0
    %621 = vmatprep.subr.mxu0 0.0
    %622 = vmatpush1.msra.mxu0 0.0
    %623 = vmatprep.subr.mxu0 0.0
    %624 = vmatpush1.msra.mxu0 0.0
    %625 = vmatprep.subr.mxu0 0.0
    %626 = vmatpush1.msra.mxu0 0.0
    %627 = vmatprep.subr.mxu0 0.0
    %628 = vmatpush1.msra.mxu0 0.0
    %629 = vmatprep.subr.mxu0 0.0
    %630 = vmatpush1.msra.mxu0 0.0
    %631 = vmatprep.subr.mxu0 0.0
    %632 = vmatpush1.msra.mxu0 0.0
    %633 = vmatprep.subr.mxu0 0.0
    %634 = vmatpush1.msra.mxu0 0.0
    %635 = vmatprep.subr.mxu0 0.0
    %636 = vmatpush1.msra.mxu0 0.0
    %637 = vmatprep.subr.mxu0 0.0
    %638 = vmatpush1.msra.mxu0 0.0
    %639 = vmatprep.subr.mxu0 0.0
    %640 = vmatpush1.msra.mxu0 0.0
    %641 = vmatprep.subr.mxu0 0.0
    %642 = vmatpush1.msra.mxu0 0.0
    %643 = vmatprep.subr.mxu0 0.0
    %644 = vmatpush1.msra.mxu0 %v95
    %645 = vmatprep.subr.mxu0 0.0
    %646 = vmatpush1.msra.mxu0 %v94
    %647 = vmatprep.subr.mxu0 0.0
    %648 = vmatpush1.msra.mxu0 %v93
    %649 = vmatprep.subr.mxu0 0.0
    %650 = vmatpush1.msra.mxu0 %v92
    %651 = vmatprep.subr.mxu0 0.0
    %652 = vmatpush2.msra.mxu0 0.0
    %653 = vmatprep.subr.mxu0 0.0
    %654 = vmatpush2.msra.mxu0 0.0
    %655 = vmatprep.subr.mxu0 0.0
    %656 = vmatpush2.msra.mxu0 0.0
    %657 = vmatprep.subr.mxu0 0.0
    %658 = vmatpush2.msra.mxu0 0.0
    %659 = vmatprep.subr.mxu0 0.0
    %660 = vmatpush2.msra.mxu0 0.0
    %661 = vmatprep.subr.mxu0 0.0
    %662 = vmatpush2.msra.mxu0 0.0
    %663 = vmatprep.subr.mxu0 0.0
    %664 = vmatpush2.msra.mxu0 0.0
    %665 = vmatprep.subr.mxu0 0.0
    %666 = vmatpush2.msra.mxu0 0.0
    %667 = vmatprep.subr.mxu0 0.0
    %668 = vmatpush2.msra.mxu0 0.0
    %669 = vmatprep.subr.mxu0 0.0
    %670 = vmatpush2.msra.mxu0 0.0
    %671 = vmatprep.subr.mxu0 0.0
    %672 = vmatpush2.msra.mxu0 0.0
    %673 = vmatprep.subr.mxu0 0.0
    %674 = vmatpush2.msra.mxu0 0.0
    %675 = vmatprep.subr.mxu0 0.0
    %676 = vmatpush2.msra.mxu0 0.0
    %677 = vmatprep.subr.mxu0 0.0
    %678 = vmatpush2.msra.mxu0 0.0
    %679 = vmatprep.subr.mxu0 0.0
    %680 = vmatpush2.msra.mxu0 0.0
    %681 = vmatprep.subr.mxu0 0.0
    %682 = vmatpush2.msra.mxu0 0.0
    %683 = vmatprep.mubr.f32.mxu0 0.0
    %684 = vmatmul.mubr.f32.gmra.mxu0 %v617
    %v685 = vpop.f32.mrf.mxu0
    %v686 = vadd.f32 0.0, %v685
    %v687 = vpop.f32.mrf.mxu0
    %688 = vdwg.mxu0
    %v689 = vmax.f32 %v175, 0.0
    %v690 = vmax.f32 %v248, 0.0
    %v691 = vmax.f32 %v321, 0.0
    %v692 = vmax.f32 %v394, 0.0
    %v693 = vmax.f32 %v467, 0.0
    %v694 = vmax.f32 %v540, 0.0
    %v695 = vmax.f32 %v613, 0.0
    %v696 = vmax.f32 %v686, 0.0
    %v705 = vlaneseq
    %v706 = vshrl.u32 %v705, 7
    %v707 = vsub.s32 0, %v706
    %v708 = vrot.slane %v96, %v707
    %v709 = vlaneseq
    %v710 = vshrl.u32 %v709, 7
    %v711 = vsub.s32 0, %v710
    %v712 = vrot.slane %v97, %v711
    %v713 = vlaneseq
    %v714 = vshrl.u32 %v713, 7
    %v715 = vsub.s32 0, %v714
    %v716 = vrot.slane %v98, %v715
    %v717 = vlaneseq
    %v718 = vshrl.u32 %v717, 7
    %v719 = vsub.s32 0, %v718
    %v720 = vrot.slane %v99, %v719
    %v721 = vlaneseq
    %v722 = vshrl.u32 %v721, 7
    %v723 = vsub.s32 0, %v722
    %v724 = vrot.slane %v100, %v723
    %v725 = vlaneseq
    %v726 = vshrl.u32 %v725, 7
    %v727 = vsub.s32 0, %v726
    %v728 = vrot.slane %v101, %v727
    %v729 = vlaneseq
    %v730 = vshrl.u32 %v729, 7
    %v731 = vsub.s32 0, %v730
    %v732 = vrot.slane %v102, %v731
    %v733 = vlaneseq
    %v734 = vshrl.u32 %v733, 7
    %v735 = vsub.s32 0, %v734
    %v736 = vrot.slane %v103, %v735
    %v745 = vmul.f32 %v689, %v708
    %v746 = vmul.f32 %v690, %v712
    %v747 = vmul.f32 %v691, %v716
    %v748 = vmul.f32 %v692, %v720
    %v749 = vmul.f32 %v693, %v724
    %v750 = vmul.f32 %v694, %v728
    %v751 = vmul.f32 %v695, %v732
    %v752 = vmul.f32 %v696, %v736
    %v753 = vsel %vm104, %v745, 0.0
    %754 = vadd.xlane.f32.xlu0 %v753
    %v755 = vpop.xlane.xlu0 %754
    %v756 = vsel %vm104, %v746, 0.0
    %757 = vadd.xlane.f32.xlu0 %v756
    %v758 = vpop.xlane.xlu0 %757
    %v759 = vsel %vm104, %v747, 0.0
    %760 = vadd.xlane.f32.xlu0 %v759
    %v761 = vpop.xlane.xlu0 %760
    %v762 = vsel %vm104, %v748, 0.0
    %763 = vadd.xlane.f32.xlu0 %v762
    %v764 = vpop.xlane.xlu0 %763
    %v765 = vsel %vm104, %v749, 0.0
    %766 = vadd.xlane.f32.xlu0 %v765
    %v767 = vpop.xlane.xlu0 %766
    %v768 = vsel %vm104, %v750, 0.0
    %769 = vadd.xlane.f32.xlu0 %v768
    %v770 = vpop.xlane.xlu0 %769
    %v771 = vsel %vm104, %v751, 0.0
    %772 = vadd.xlane.f32.xlu0 %v771
    %v773 = vpop.xlane.xlu0 %772
    %v774 = vsel %vm104, %v752, 0.0
    %775 = vadd.xlane.f32.xlu0 %v774
    %v776 = vpop.xlane.xlu0 %775
    %v785 = vlaneseq
    %v786 = vand.u32 %v785, 127
    %v787 = vlaneseq
    %v788 = vshrl.u32 %v787, 7
    %v789 = vsub.s32 %v786, %v788
    %v790 = vrot.slane %v755, %v789
    %v791 = vlaneseq
    %v792 = vshrl.u32 %v791, 7
    %v793 = vsub.s32 %v786, %v792
    %v794 = vrot.slane %v758, %v793
    %v795 = vlaneseq
    %v796 = vshrl.u32 %v795, 7
    %v797 = vsub.s32 %v786, %v796
    %v798 = vrot.slane %v761, %v797
    %v799 = vlaneseq
    %v800 = vshrl.u32 %v799, 7
    %v801 = vsub.s32 %v786, %v800
    %v802 = vrot.slane %v764, %v801
    %v803 = vlaneseq
    %v804 = vshrl.u32 %v803, 7
    %v805 = vsub.s32 %v786, %v804
    %v806 = vrot.slane %v767, %v805
    %v807 = vlaneseq
    %v808 = vshrl.u32 %v807, 7
    %v809 = vsub.s32 %v786, %v808
    %v810 = vrot.slane %v770, %v809
    %v811 = vlaneseq
    %v812 = vshrl.u32 %v811, 7
    %v813 = vsub.s32 %v786, %v812
    %v814 = vrot.slane %v773, %v813
    %v815 = vlaneseq
    %v816 = vshrl.u32 %v815, 7
    %v817 = vsub.s32 %v786, %v816
    %v818 = vrot.slane %v776, %v817
    %vm819 = vcmask 1041409
    %v820 = vsel %vm819, %v794, %v790
    %vm821 = vcmask 1042434
    %v822 = vsel %vm821, %v798, %v820
    %vm823 = vcmask 1043459
    %v824 = vsel %vm823, %v802, %v822
    %vm825 = vcmask 1044484
    %v826 = vsel %vm825, %v806, %v824
    %vm827 = vcmask 1045509
    %v828 = vsel %vm827, %v810, %v826
    %vm829 = vcmask 1046534
    %v830 = vsel %vm829, %v814, %v828
    %vm831 = vcmask 1047559
    %v832 = vsel %vm831, %v818, %v830
    %vm834 = vcmask 64512
    %v835 = vsel %vm834, %v832, -inf
    %836 = vmax.xlane.f32.xlu0 %v835
    %v837 = vpop.xlane.xlu0 %836
    %v839 = vlaneseq
    %v840 = vshrl.u32 %v839, 7
    %v841 = vsub.s32 0, %v840
    %v842 = vrot.slane %v837, %v841
    %v843 = vlaneseq
    %v844 = vshrl.u32 %v843, 7
    %v845 = vsub.s32 1, %v844
    %v846 = vrot.slane %v837, %v845
    %v847 = vlaneseq
    %v848 = vshrl.u32 %v847, 7
    %v849 = vsub.s32 2, %v848
    %v850 = vrot.slane %v837, %v849
    %v851 = vlaneseq
    %v852 = vshrl.u32 %v851, 7
    %v853 = vsub.s32 3, %v852
    %v854 = vrot.slane %v837, %v853
    %v855 = vlaneseq
    %v856 = vshrl.u32 %v855, 7
    %v857 = vsub.s32 4, %v856
    %v858 = vrot.slane %v837, %v857
    %v859 = vlaneseq
    %v860 = vshrl.u32 %v859, 7
    %v861 = vsub.s32 5, %v860
    %v862 = vrot.slane %v837, %v861
    %v863 = vlaneseq
    %v864 = vshrl.u32 %v863, 7
    %v865 = vsub.s32 6, %v864
    %v866 = vrot.slane %v837, %v865
    %v867 = vlaneseq
    %v868 = vshrl.u32 %v867, 7
    %v869 = vsub.s32 7, %v868
    %v870 = vrot.slane %v837, %v869
    %v879 = vsub.f32 %v755, %v842
    %v880 = vsub.f32 %v758, %v846
    %v881 = vsub.f32 %v761, %v850
    %v882 = vsub.f32 %v764, %v854
    %v883 = vsub.f32 %v767, %v858
    %v884 = vsub.f32 %v770, %v862
    %v885 = vsub.f32 %v773, %v866
    %v886 = vsub.f32 %v776, %v870
    %v887 = vmul.f32 %v879, 1.442695
    %v888 = vpow.pop %v887
    %v889 = vmul.f32 %v880, 1.442695
    %v890 = vpow.pop %v889
    %v891 = vmul.f32 %v881, 1.442695
    %v892 = vpow.pop %v891
    %v893 = vmul.f32 %v882, 1.442695
    %v894 = vpow.pop %v893
    %v895 = vmul.f32 %v883, 1.442695
    %v896 = vpow.pop %v895
    %v897 = vmul.f32 %v884, 1.442695
    %v898 = vpow.pop %v897
    %v899 = vmul.f32 %v885, 1.442695
    %v900 = vpow.pop %v899
    %v901 = vmul.f32 %v886, 1.442695
    %v902 = vpow.pop %v901
    %911 = vset.pattern.permute.xlu0 0
    %912 = vperm.xlu0 %911, %v888
    %v913 = vpop.permute.xlu0 %912
    %914 = vset.pattern.permute.xlu0 0
    %915 = vperm.xlu0 %914, %v890
    %v916 = vpop.permute.xlu0 %915
    %917 = vset.pattern.permute.xlu0 0
    %918 = vperm.xlu0 %917, %v892
    %v919 = vpop.permute.xlu0 %918
    %920 = vset.pattern.permute.xlu0 0
    %921 = vperm.xlu0 %920, %v894
    %v922 = vpop.permute.xlu0 %921
    %923 = vset.pattern.permute.xlu0 0
    %924 = vperm.xlu0 %923, %v896
    %v925 = vpop.permute.xlu0 %924
    %926 = vset.pattern.permute.xlu0 0
    %927 = vperm.xlu0 %926, %v898
    %v928 = vpop.permute.xlu0 %927
    %929 = vset.pattern.permute.xlu0 0
    %930 = vperm.xlu0 %929, %v900
    %v931 = vpop.permute.xlu0 %930
    %932 = vset.pattern.permute.xlu0 0
    %933 = vperm.xlu0 %932, %v902
    %v934 = vpop.permute.xlu0 %933
    %v935 = vlaneseq
    %v936 = vshrl.u32 %v935, 7
    %v937 = vsub.s32 %v786, %v936
    %v938 = vrot.slane %v913, %v937
    %v939 = vlaneseq
    %v940 = vshrl.u32 %v939, 7
    %v941 = vsub.s32 %v786, %v940
    %v942 = vrot.slane %v916, %v941
    %v943 = vlaneseq
    %v944 = vshrl.u32 %v943, 7
    %v945 = vsub.s32 %v786, %v944
    %v946 = vrot.slane %v919, %v945
    %v947 = vlaneseq
    %v948 = vshrl.u32 %v947, 7
    %v949 = vsub.s32 %v786, %v948
    %v950 = vrot.slane %v922, %v949
    %v951 = vlaneseq
    %v952 = vshrl.u32 %v951, 7
    %v953 = vsub.s32 %v786, %v952
    %v954 = vrot.slane %v925, %v953
    %v955 = vlaneseq
    %v956 = vshrl.u32 %v955, 7
    %v957 = vsub.s32 %v786, %v956
    %v958 = vrot.slane %v928, %v957
    %v959 = vlaneseq
    %v960 = vshrl.u32 %v959, 7
    %v961 = vsub.s32 %v786, %v960
    %v962 = vrot.slane %v931, %v961
    %v963 = vlaneseq
    %v964 = vshrl.u32 %v963, 7
    %v965 = vsub.s32 %v786, %v964
    %v966 = vrot.slane %v934, %v965
    %v967 = vsel %vm819, %v942, %v938
    %v968 = vsel %vm821, %v946, %v967
    %v969 = vsel %vm823, %v950, %v968
    %v970 = vsel %vm825, %v954, %v969
    %v971 = vsel %vm827, %v958, %v970
    %v972 = vsel %vm829, %v962, %v971
    %v973 = vsel %vm831, %v966, %v972
    %v975 = vsel %vm834, %v973, 0.0
    %976 = vadd.xlane.f32.xlu0 %v975
    %v977 = vpop.xlane.xlu0 %976
    %v979 = vlaneseq
    %v980 = vshrl.u32 %v979, 7
    %v981 = vsub.s32 0, %v980
    %v982 = vrot.slane %v977, %v981
    %v983 = vlaneseq
    %v984 = vshrl.u32 %v983, 7
    %v985 = vsub.s32 1, %v984
    %v986 = vrot.slane %v977, %v985
    %v987 = vlaneseq
    %v988 = vshrl.u32 %v987, 7
    %v989 = vsub.s32 2, %v988
    %v990 = vrot.slane %v977, %v989
    %v991 = vlaneseq
    %v992 = vshrl.u32 %v991, 7
    %v993 = vsub.s32 3, %v992
    %v994 = vrot.slane %v977, %v993
    %v995 = vlaneseq
    %v996 = vshrl.u32 %v995, 7
    %v997 = vsub.s32 4, %v996
    %v998 = vrot.slane %v977, %v997
    %v999 = vlaneseq
    %v1000 = vshrl.u32 %v999, 7
    %v1001 = vsub.s32 5, %v1000
    %v1002 = vrot.slane %v977, %v1001
    %v1003 = vlaneseq
    %v1004 = vshrl.u32 %v1003, 7
    %v1005 = vsub.s32 6, %v1004
    %v1006 = vrot.slane %v977, %v1005
    %v1007 = vlaneseq
    %v1008 = vshrl.u32 %v1007, 7
    %v1009 = vsub.s32 7, %v1008
    %v1010 = vrot.slane %v977, %v1009
    %v1019 = vrcp.pop %v982
    %v1020 = vmul.f32 %v888, %v1019
    %v1021 = vrcp.pop %v986
    %v1022 = vmul.f32 %v890, %v1021
    %v1023 = vrcp.pop %v990
    %v1024 = vmul.f32 %v892, %v1023
    %v1025 = vrcp.pop %v994
    %v1026 = vmul.f32 %v894, %v1025
    %v1027 = vrcp.pop %v998
    %v1028 = vmul.f32 %v896, %v1027
    %v1029 = vrcp.pop %v1002
    %v1030 = vmul.f32 %v898, %v1029
    %v1031 = vrcp.pop %v1006
    %v1032 = vmul.f32 %v900, %v1031
    %v1033 = vrcp.pop %v1010
    %v1034 = vmul.f32 %v902, %v1033
    %1043 = vset.pattern.permute.xlu0 0
    %1044 = vperm.xlu0 %1043, %v1020
    %v1045 = vpop.permute.xlu0 %1044
    %1046 = vset.pattern.permute.xlu0 0
    %1047 = vperm.xlu0 %1046, %v1022
    %v1048 = vpop.permute.xlu0 %1047
    %1049 = vset.pattern.permute.xlu0 0
    %1050 = vperm.xlu0 %1049, %v1024
    %v1051 = vpop.permute.xlu0 %1050
    %1052 = vset.pattern.permute.xlu0 0
    %1053 = vperm.xlu0 %1052, %v1026
    %v1054 = vpop.permute.xlu0 %1053
    %1055 = vset.pattern.permute.xlu0 0
    %1056 = vperm.xlu0 %1055, %v1028
    %v1057 = vpop.permute.xlu0 %1056
    %1058 = vset.pattern.permute.xlu0 0
    %1059 = vperm.xlu0 %1058, %v1030
    %v1060 = vpop.permute.xlu0 %1059
    %1061 = vset.pattern.permute.xlu0 0
    %1062 = vperm.xlu0 %1061, %v1032
    %v1063 = vpop.permute.xlu0 %1062
    %1064 = vset.pattern.permute.xlu0 0
    %1065 = vperm.xlu0 %1064, %v1034
    %v1066 = vpop.permute.xlu0 %1065
    %v1067 = vlaneseq
    %v1068 = vshrl.u32 %v1067, 7
    %v1069 = vsub.s32 %v786, %v1068
    %v1070 = vrot.slane %v1045, %v1069
    %v1071 = vlaneseq
    %v1072 = vshrl.u32 %v1071, 7
    %v1073 = vsub.s32 %v786, %v1072
    %v1074 = vrot.slane %v1048, %v1073
    %v1075 = vlaneseq
    %v1076 = vshrl.u32 %v1075, 7
    %v1077 = vsub.s32 %v786, %v1076
    %v1078 = vrot.slane %v1051, %v1077
    %v1079 = vlaneseq
    %v1080 = vshrl.u32 %v1079, 7
    %v1081 = vsub.s32 %v786, %v1080
    %v1082 = vrot.slane %v1054, %v1081
    %v1083 = vlaneseq
    %v1084 = vshrl.u32 %v1083, 7
    %v1085 = vsub.s32 %v786, %v1084
    %v1086 = vrot.slane %v1057, %v1085
    %v1087 = vlaneseq
    %v1088 = vshrl.u32 %v1087, 7
    %v1089 = vsub.s32 %v786, %v1088
    %v1090 = vrot.slane %v1060, %v1089
    %v1091 = vlaneseq
    %v1092 = vshrl.u32 %v1091, 7
    %v1093 = vsub.s32 %v786, %v1092
    %v1094 = vrot.slane %v1063, %v1093
    %v1095 = vlaneseq
    %v1096 = vshrl.u32 %v1095, 7
    %v1097 = vsub.s32 %v786, %v1096
    %v1098 = vrot.slane %v1066, %v1097
    %v1099 = vsel %vm819, %v1074, %v1070
    %v1100 = vsel %vm821, %v1078, %v1099
    %v1101 = vsel %vm823, %v1082, %v1100
    %v1102 = vsel %vm825, %v1086, %v1101
    %v1103 = vsel %vm827, %v1090, %v1102
    %v1104 = vsel %vm829, %v1094, %v1103
    %v1105 = vsel %vm831, %v1098, %v1104
    %1107 = vst.msk [vmem:[#allocation8] sm:$0xff] %vm834, %v1105
    // Predicated region
    $region26: #{tpu_custom_call.1} parent=1 // pred_check
      _
    $region27: #{tpu_custom_call.1} parent=1 // pred_check_branch
      %1109 = sbr.rel (0) target = $region29
    $region28: #{tpu_custom_call.1} parent=1 // pred_region
      %s1111 = ssub.s32 128, 128
      %1112 = vsyncadd [#allocation4], %s1111
      %s1114 = sshll.u32 [#allocation8], 4
      %s1115 = int_to_ptr.vmem [resolvable:$true] %s1114
      %1117 = dma.vmem_to_hbm [thread:$0]  %s1115, 128, %s3, [#allocation4]
    $region29: #{tpu_custom_call.1} parent=1 // pred_fallthru
      _
    // Predicated region
    $region30: #{tpu_custom_call.1} parent=1 // pred_check
      _
    $region31: #{tpu_custom_call.1} parent=1 // pred_check_branch
      %1119 = sbr.rel (0) target = $region33
    $region32: #{tpu_custom_call.1} parent=1 // pred_region
      %1120 = dma.done [#allocation4], 128
    $region33: #{tpu_custom_call.1} parent=1 // pred_fallthru
      _
    %1121 = vsyncpa [#allocation3], 1
    %1122 = vsyncpa [#allocation6], 1
    %1123 = vsyncpa [#allocation4], 1

</llo_original>
